<compile_context>
chip_gen: v7x
topology: tpu7x:2x2x1
jax: 0.10.0
libtpu: 0.0.40
codegen_flags: <defaults>
</compile_context>

<pallas_src>
from functools import partial
from typing import NamedTuple

import jax
import jax.numpy as jnp
from jax.experimental import pallas as pl
from jax.experimental.pallas import tpu as pltpu


def _round_up(x, m):
    return ((x + m - 1) // m) * m


def _cdiv(a, b):
    return -(-a // b)


def _device_kind():
    try:
        return jax.devices()[0].device_kind.lower()
    except Exception:
        return ""


def _vmem_capacity_bytes(kind):
    """Physical VMEM per core (best effort, conservative fallback)."""
    try:
        info = pltpu.get_tpu_info()
        for attr in ("vmem_capacity_bytes", "vmem_size_bytes"):
            cap = getattr(info, attr, None)
            if cap:
                return int(cap)
    except Exception:
        pass
    if "v7" in kind:
        return 64 * 1024 * 1024
    if "v5" in kind or "v6" in kind:
        return 128 * 1024 * 1024
    return 64 * 1024 * 1024  # unknown generation: be conservative


class GenPlan(NamedTuple):
    z_dim: int
    h_dim: int
    out_dim: int
    out_pad: int
    tn: int
    tm_cap: int
    vmem_limit: int


def make_generator_plan(z_dim, h_dim, out_dim, *, max_tn=None, tm_cap=None):
    """One-time tiling plan (generation-aware VMEM budget, lane-dense tiles)."""
    kind = _device_kind()
    vmem_cap = _vmem_capacity_bytes(kind)
    budget = (vmem_cap * 3) // 4           # ~48 MiB on v7x, ~96 MiB on v5e/v6e

    if tm_cap is None:
        tm_cap = 256 if ("v6" in kind or "v7" in kind) else 128
    tm_cap = max(16, _round_up(tm_cap, 16))

    out_pad128 = _round_up(out_dim, 128)

    # Conservative VMEM footprint model (double-buffer everything Pallas does).
    fixed = (2 * (z_dim * h_dim * 2            # W1^T bf16
                  + h_dim * h_dim * 2          # W2^T bf16
                  + 2 * h_dim * 4              # b1, b2 f32
                  + tm_cap * z_dim * 4)        # z tile f32
             + tm_cap * h_dim * 2)             # h2 scratch bf16
    per_col = 2 * (h_dim * 2 + 4 + tm_cap * 2)  # W3^T col + b3 col + out col

    budget_tn = max(128, ((budget - fixed) // per_col) // 128 * 128)
    if max_tn is not None:
        budget_tn = min(budget_tn, max(128, (max_tn // 128) * 128))

    # Even split of the 128-padded width into lane-dense tiles that fit VMEM.
    n_j = _cdiv(out_pad128, budget_tn)
    tn = _round_up(_cdiv(out_pad128, n_j), 128)
    out_pad = tn * n_j

    return GenPlan(z_dim=z_dim, h_dim=h_dim, out_dim=out_dim, out_pad=out_pad,
                   tn=tn, tm_cap=tm_cap, vmem_limit=int(budget))


def prepare_generator_params(params, plan):
    """One-time prep OUTSIDE the hot path: transpose, bf16-cast, lane padding.

    Input layout follows PyTorch nn.Linear: W (out_features, in_features),
    b (out_features,). Biases stay f32 for the f32 accumulate path.
    """
    w1, b1, w2, b2, w3, b3 = params
    assert w1.shape == (plan.h_dim, plan.z_dim)
    assert w2.shape == (plan.h_dim, plan.h_dim)
    assert w3.shape == (plan.out_dim, plan.h_dim)
    pad = plan.out_pad - plan.out_dim

    w1_t = w1.T.astype(jnp.bfloat16)                               # (z, h)
    w2_t = w2.T.astype(jnp.bfloat16)                               # (h, h)
    w3_t = jnp.pad(w3.T, ((0, 0), (0, pad))).astype(jnp.bfloat16)  # (h, out_pad)
    b1_r = b1.reshape(1, -1).astype(jnp.float32)
    b2_r = b2.reshape(1, -1).astype(jnp.float32)
    b3_r = jnp.pad(b3, (0, pad)).reshape(1, -1).astype(jnp.float32)
    return (w1_t, b1_r, w2_t, b2_r, w3_t, b3_r)


def _generator_kernel_carry(z_ref, w1_ref, b1_ref, w2_ref, b2_ref, w3_ref,
                            b3_ref, out_ref, h2_ref):
    """Grid (i, j): fc1/fc2 computed once per batch tile (j==0) into a bf16
    VMEM scratch and reused for every fc3 output tile of that batch tile."""
    @pl.when(pl.program_id(1) == 0)
    def _():
        z = z_ref[...].astype(jnp.bfloat16)
        h1 = jnp.dot(z, w1_ref[...], preferred_element_type=jnp.float32)
        h1 = jnp.maximum(h1 + b1_ref[...], 0.0)
        h2 = jnp.dot(h1.astype(jnp.bfloat16), w2_ref[...],
                     preferred_element_type=jnp.float32)
        h2_ref[...] = jnp.maximum(h2 + b2_ref[...], 0.0).astype(jnp.bfloat16)

    o = jnp.dot(h2_ref[...], w3_ref[...], preferred_element_type=jnp.float32)
    o = jnp.tanh(o + b3_ref[...])
    out_ref[...] = o.astype(out_ref.dtype)


def _generator_kernel_recompute(z_ref, w1_ref, b1_ref, w2_ref, b2_ref, w3_ref,
                                b3_ref, out_ref):
    """No carried state: fc1/fc2 recomputed per grid step so both grid axes can
    be 'parallel' (keeps the second v7x TensorCore busy for single-batch-tile
    or single-output-tile shapes)."""
    z = z_ref[...].astype(jnp.bfloat16)
    h1 = jnp.dot(z, w1_ref[...], preferred_element_type=jnp.float32)
    h1 = jnp.maximum(h1 + b1_ref[...], 0.0)
    h2 = jnp.dot(h1.astype(jnp.bfloat16), w2_ref[...],
                 preferred_element_type=jnp.float32)
    h2 = jnp.maximum(h2 + b2_ref[...], 0.0).astype(jnp.bfloat16)
    o = jnp.dot(h2, w3_ref[...], preferred_element_type=jnp.float32)
    o = jnp.tanh(o + b3_ref[...])
    out_ref[...] = o.astype(out_ref.dtype)


@partial(jax.jit, static_argnums=(2, 3, 4))
def generator_forward(z, prepared_params, plan, n_channels, image_size):
    """z: (B, z_dim) f32. Returns (B, C, H, W) f32 (NCHW), PyTorch semantics."""
    w1_t, b1_r, w2_t, b2_r, w3_t, b3_r = prepared_params
    B, z_dim = z.shape
    h_dim, tn, out_pad = plan.h_dim, plan.tn, plan.out_pad
    out_dim = n_channels * image_size * image_size
    assert z_dim == plan.z_dim and out_dim == plan.out_dim
    assert w3_t.shape == (h_dim, out_pad), "params not prepared for this plan"

    # Batch tiling: even split, multiple of 16 (bf16 sublane packing).
    n_i = _cdiv(B, plan.tm_cap)
    tm = min(plan.tm_cap, _round_up(_cdiv(B, n_i), 16))
    b_pad = tm * n_i
    if b_pad != B:
        z = jnp.pad(z, ((0, b_pad - B), (0, 0)))

    n_j = out_pad // tn
    use_carry = (n_i > 1) and (n_j > 1)

    in_specs = [
        pl.BlockSpec((tm, z_dim), lambda i, j: (i, 0)),      # z tile
        pl.BlockSpec((z_dim, h_dim), lambda i, j: (0, 0)),   # W1^T resident
        pl.BlockSpec((1, h_dim), lambda i, j: (0, 0)),       # b1 resident
        pl.BlockSpec((h_dim, h_dim), lambda i, j: (0, 0)),   # W2^T resident
        pl.BlockSpec((1, h_dim), lambda i, j: (0, 0)),       # b2 resident
        pl.BlockSpec((h_dim, tn), lambda i, j: (0, j)),      # W3^T tile
        pl.BlockSpec((1, tn), lambda i, j: (0, j)),          # b3 tile
    ]
    out_spec = pl.BlockSpec((tm, tn), lambda i, j: (i, j))

    if use_carry:
        kernel = _generator_kernel_carry
        scratch = [pltpu.VMEM((tm, h_dim), jnp.bfloat16)]    # bf16 h2 carry
        dims = ("parallel", "arbitrary")
    else:
        kernel = _generator_kernel_recompute
        scratch = []
        dims = ("parallel", "parallel")

    # Advisory cost estimate (W3 is re-streamed once per batch tile only when
    # it is actually tiled along j).
    fc12_mult = 1 if use_carry else n_j
    flops = (2 * b_pad * (z_dim * h_dim + h_dim * h_dim) * fc12_mult
             + 2 * b_pad * h_dim * out_pad)
    w3_reads = n_i if n_j > 1 else 1
    bytes_accessed = (b_pad * z_dim * 4
                      + (w1_t.size + w2_t.size) * 2
                      + w3_t.size * 2 * w3_reads
                      + (b1_r.size + b2_r.size + b3_r.size) * 4
                      + b_pad * out_pad * 2)
    cost = pl.CostEstimate(flops=flops, transcendentals=b_pad * out_pad,
                           bytes_accessed=bytes_accessed)

    flat = pl.pallas_call(
        kernel,
        out_shape=jax.ShapeDtypeStruct((b_pad, out_pad), jnp.bfloat16),
        grid=(n_i, n_j),
        in_specs=in_specs,
        out_specs=out_spec,
        scratch_shapes=scratch,
        compiler_params=pltpu.CompilerParams(
            dimension_semantics=dims,
            vmem_limit_bytes=plan.vmem_limit),
        cost_estimate=cost,
    )(z, w1_t, b1_r, w2_t, b2_r, w3_t, b3_r)

    # Drop batch / lane padding, back to f32, PyTorch-style NCHW reshape.
    flat = flat[:B, :out_dim].astype(jnp.float32)
    return flat.reshape(B, n_channels, image_size, image_size)


def init_generator_params(key, z_dim, h_dim, n_channels, image_size):
    """Deterministic synthetic init, PyTorch nn.Linear shapes."""
    out_dim = n_channels * image_size * image_size
    k1, k2, k3, k4, k5, k6 = jax.random.split(key, 6)
    w1 = 0.02 * jax.random.normal(k1, (h_dim, z_dim), jnp.float32)
    b1 = 0.01 * jax.random.normal(k4, (h_dim,), jnp.float32)
    w2 = 0.02 * jax.random.normal(k2, (h_dim, h_dim), jnp.float32)
    b2 = 0.01 * jax.random.normal(k5, (h_dim,), jnp.float32)
    w3 = 0.02 * jax.random.normal(k3, (out_dim, h_dim), jnp.float32)
    b3 = 0.01 * jax.random.normal(k6, (out_dim,), jnp.float32)
    return (w1, b1, w2, b2, w3, b3)


if __name__ == "__main__":
    # Small shapes consistent with the module's forward.
    Z_DIM, H_DIM, N_CHANNELS, IMAGE_SIZE = 16, 128, 3, 8
    OUT_DIM = N_CHANNELS * IMAGE_SIZE * IMAGE_SIZE  # 192 -> lane-padded to 256

    key = jax.random.PRNGKey(0)
    k_params, k_z1, k_z2 = jax.random.split(key, 3)
    params = init_generator_params(k_params, Z_DIM, H_DIM, N_CHANNELS,
                                   IMAGE_SIZE)
    w1, b1, w2, b2, w3, b3 = params

    def reference(zz):
        h1 = jnp.maximum(zz @ w1.T + b1, 0.0)
        h2 = jnp.maximum(h1 @ w2.T + b2, 0.0)
        o = jnp.tanh(h2 @ w3.T + b3)
        return o.reshape(-1, N_CHANNELS, IMAGE_SIZE, IMAGE_SIZE)

    # Case 1: default plan -> single output tile, recompute kernel, both grid
    # axes "parallel" (W3 fetched once, no carried state).
    z1 = jax.random.normal(k_z1, (8, Z_DIM), jnp.float32)
    plan1 = make_generator_plan(Z_DIM, H_DIM, OUT_DIM)
    prep1 = prepare_generator_params(params, plan1)
    out1 = jax.block_until_ready(
        generator_forward(z1, prep1, plan1, N_CHANNELS, IMAGE_SIZE))
    assert out1.shape == (8, N_CHANNELS, IMAGE_SIZE, IMAGE_SIZE)
    assert jnp.allclose(out1, reference(z1), atol=2e-2, rtol=2e-2)

    # Case 2: force small tiles (multi batch-tile x multi output-tile) so the
    # carried-bf16-h2 kernel and W3 streaming path are also exercised.
    z2 = jax.random.normal(k_z2, (40, Z_DIM), jnp.float32)
    plan2 = make_generator_plan(Z_DIM, H_DIM, OUT_DIM, max_tn=128, tm_cap=16)
    prep2 = prepare_generator_params(params, plan2)
    out2 = jax.block_until_ready(
        generator_forward(z2, prep2, plan2, N_CHANNELS, IMAGE_SIZE))
    assert out2.shape == (40, N_CHANNELS, IMAGE_SIZE, IMAGE_SIZE)
    assert jnp.allclose(out2, reference(z2), atol=2e-2, rtol=2e-2)

    print("KERNEL_OK")
</pallas_src>

<mosaic_0001>
module attributes {stable_mosaic.version = 11 : i64} {
  func.func @_generator_kernel_recompute(%arg0: i32, %arg1: i32, %arg2: memref<16x16xf32, #tpu.memory_space<vmem>>, %arg3: memref<16x128xbf16, #tpu.memory_space<vmem>>, %arg4: memref<1x128xf32, #tpu.memory_space<vmem>>, %arg5: memref<128x128xbf16, #tpu.memory_space<vmem>>, %arg6: memref<1x128xf32, #tpu.memory_space<vmem>>, %arg7: memref<128x256xbf16, #tpu.memory_space<vmem>>, %arg8: memref<1x256xf32, #tpu.memory_space<vmem>>, %arg9: memref<16x256xbf16, #tpu.memory_space<vmem>>) attributes {dimension_semantics = [#tpu.dimension_semantics<parallel>, #tpu.dimension_semantics<parallel>], iteration_bounds = array<i64: 1, 1>, scalar_prefetch = 0 : i64, scratch_operands = 0 : i64, tpu.core_type = #tpu.core_type<tc>, window_params = [{transform_indices = @transform_0, window_bounds = array<i64: 16, 16>}, {pipeline_mode = #tpu.pipeline_mode<synchronous>, transform_indices = @transform_1, window_bounds = array<i64: 16, 128>}, {pipeline_mode = #tpu.pipeline_mode<synchronous>, transform_indices = @transform_2, window_bounds = array<i64: 1, 128>}, {pipeline_mode = #tpu.pipeline_mode<synchronous>, transform_indices = @transform_3, window_bounds = array<i64: 128, 128>}, {pipeline_mode = #tpu.pipeline_mode<synchronous>, transform_indices = @transform_4, window_bounds = array<i64: 1, 128>}, {transform_indices = @transform_5, window_bounds = array<i64: 128, 256>}, {transform_indices = @transform_6, window_bounds = array<i64: 1, 256>}, {transform_indices = @transform_7, window_bounds = array<i64: 16, 256>}]} {
    %c0 = arith.constant 0 : index
    %c0_0 = arith.constant 0 : index
    %0 = vector.load %arg2[%c0, %c0_0] : memref<16x16xf32, #tpu.memory_space<vmem>>, vector<16x16xf32>
    %1 = arith.truncf %0 : vector<16x16xf32> to vector<16x16xbf16>
    %c0_1 = arith.constant 0 : index
    %c0_2 = arith.constant 0 : index
    %2 = vector.load %arg3[%c0_1, %c0_2] : memref<16x128xbf16, #tpu.memory_space<vmem>>, vector<16x128xbf16>
    %cst = arith.constant dense<0.000000e+00> : vector<16x128xf32>
    %3 = tpu.matmul %1, %2, %cst {dimension_numbers = #tpu.dot_dimension_numbers<[1], [0], [0], [1], [0, 0, 1, 1], [], []>} : vector<16x16xbf16>, vector<16x128xbf16>, vector<16x128xf32> -> vector<16x128xf32>
    %c0_3 = arith.constant 0 : index
    %c0_4 = arith.constant 0 : index
    %4 = vector.load %arg4[%c0_3, %c0_4] : memref<1x128xf32, #tpu.memory_space<vmem>>, vector<1x128xf32>
    %5 = vector.broadcast %4 : vector<1x128xf32> to vector<16x128xf32>
    %6 = arith.addf %3, %5 : vector<16x128xf32>
    %cst_5 = arith.constant 0.000000e+00 : f32
    %7 = vector.broadcast %cst_5 : f32 to vector<16x128xf32>
    %8 = arith.maximumf %6, %7 : vector<16x128xf32>
    %9 = arith.truncf %8 : vector<16x128xf32> to vector<16x128xbf16>
    %c0_6 = arith.constant 0 : index
    %c0_7 = arith.constant 0 : index
    %10 = vector.load %arg5[%c0_6, %c0_7] : memref<128x128xbf16, #tpu.memory_space<vmem>>, vector<128x128xbf16>
    %cst_8 = arith.constant dense<0.000000e+00> : vector<16x128xf32>
    %11 = tpu.matmul %9, %10, %cst_8 {dimension_numbers = #tpu.dot_dimension_numbers<[1], [0], [0], [1], [0, 0, 1, 1], [], []>} : vector<16x128xbf16>, vector<128x128xbf16>, vector<16x128xf32> -> vector<16x128xf32>
    %c0_9 = arith.constant 0 : index
    %c0_10 = arith.constant 0 : index
    %12 = vector.load %arg6[%c0_9, %c0_10] : memref<1x128xf32, #tpu.memory_space<vmem>>, vector<1x128xf32>
    %13 = vector.broadcast %12 : vector<1x128xf32> to vector<16x128xf32>
    %14 = arith.addf %11, %13 : vector<16x128xf32>
    %cst_11 = arith.constant 0.000000e+00 : f32
    %15 = vector.broadcast %cst_11 : f32 to vector<16x128xf32>
    %16 = arith.maximumf %14, %15 : vector<16x128xf32>
    %17 = arith.truncf %16 : vector<16x128xf32> to vector<16x128xbf16>
    %c0_12 = arith.constant 0 : index
    %c0_13 = arith.constant 0 : index
    %18 = vector.load %arg7[%c0_12, %c0_13] : memref<128x256xbf16, #tpu.memory_space<vmem>>, vector<128x256xbf16>
    %cst_14 = arith.constant dense<0.000000e+00> : vector<16x256xf32>
    %19 = tpu.matmul %17, %18, %cst_14 {dimension_numbers = #tpu.dot_dimension_numbers<[1], [0], [0], [1], [0, 0, 1, 1], [], []>} : vector<16x128xbf16>, vector<128x256xbf16>, vector<16x256xf32> -> vector<16x256xf32>
    %c0_15 = arith.constant 0 : index
    %c0_16 = arith.constant 0 : index
    %20 = vector.load %arg8[%c0_15, %c0_16] : memref<1x256xf32, #tpu.memory_space<vmem>>, vector<1x256xf32>
    %21 = vector.broadcast %20 : vector<1x256xf32> to vector<16x256xf32>
    %22 = arith.addf %19, %21 : vector<16x256xf32>
    %23 = math.tanh %22 : vector<16x256xf32>
    %24 = arith.truncf %23 : vector<16x256xf32> to vector<16x256xbf16>
    %c0_17 = arith.constant 0 : index
    %c0_18 = arith.constant 0 : index
    %25 = vector.load %arg9[%c0_17, %c0_18] : memref<16x256xbf16, #tpu.memory_space<vmem>>, vector<16x256xbf16>
    tpu.vector_store %arg9[%c0_17, %c0_18], %24 {strides = array<i32>} : memref<16x256xbf16, #tpu.memory_space<vmem>>, vector<16x256xbf16>,
    return
  }
  func.func @transform_0(%arg0: i32, %arg1: i32) -> (i32, i32) {
    %c0_i32 = arith.constant 0 : i32
    %c0_i32_0 = arith.constant 0 : i32
    return %arg0, %c0_i32 : i32, i32
  }
  func.func @transform_1(%arg0: i32, %arg1: i32) -> (i32, i32) {
    %c0_i32 = arith.constant 0 : i32
    %c0_i32_0 = arith.constant 0 : i32
    %c0_i32_1 = arith.constant 0 : i32
    return %c0_i32, %c0_i32_0 : i32, i32
  }
  func.func @transform_2(%arg0: i32, %arg1: i32) -> (i32, i32) {
    %c0_i32 = arith.constant 0 : i32
    %c0_i32_0 = arith.constant 0 : i32
    %c0_i32_1 = arith.constant 0 : i32
    return %c0_i32, %c0_i32_0 : i32, i32
  }
  func.func @transform_3(%arg0: i32, %arg1: i32) -> (i32, i32) {
    %c0_i32 = arith.constant 0 : i32
    %c0_i32_0 = arith.constant 0 : i32
    %c0_i32_1 = arith.constant 0 : i32
    return %c0_i32, %c0_i32_0 : i32, i32
  }
  func.func @transform_4(%arg0: i32, %arg1: i32) -> (i32, i32) {
    %c0_i32 = arith.constant 0 : i32
    %c0_i32_0 = arith.constant 0 : i32
    %c0_i32_1 = arith.constant 0 : i32
    return %c0_i32, %c0_i32_0 : i32, i32
  }
  func.func @transform_5(%arg0: i32, %arg1: i32) -> (i32, i32) {
    %c0_i32 = arith.constant 0 : i32
    %c0_i32_0 = arith.constant 0 : i32
    return %c0_i32, %arg1 : i32, i32
  }
  func.func @transform_6(%arg0: i32, %arg1: i32) -> (i32, i32) {
    %c0_i32 = arith.constant 0 : i32
    %c0_i32_0 = arith.constant 0 : i32
    return %c0_i32, %arg1 : i32, i32
  }
  func.func @transform_7(%arg0: i32, %arg1: i32) -> (i32, i32) {
    %c0_i32 = arith.constant 0 : i32
    return %arg0, %arg1 : i32, i32
  }
}

</mosaic_0001>

<llo_original>
// kernel: generator_forward.1
$region0: #{generator_forward.1}
  #allocation0 [shape = 'u32[]', space=smem, size = 0x4, offset = 0x4, fixed_abs, tag = 'smem constant byte address 0x4 - core index']
  #allocation1 [shape = 'u32[144,128]{1,0:T(1,128)}', space=vmem, size = 0x12000, scoped, tag = 'internal scratch']
  %s0 = inlined_call_operand.vmem [shape: f32[16,16], index: 0, kind: input, shape index: {}]
  %s1 = inlined_call_operand.vmem [shape: bf16[16,128], index: 1, kind: input, shape index: {}]
  %s2 = inlined_call_operand.vmem [shape: f32[1,128], index: 2, kind: input, shape index: {}]
  %s3 = inlined_call_operand.hbm [shape: bf16[128,128], index: 3, kind: input, shape index: {}]
  %s4 = inlined_call_operand.vmem [shape: f32[1,128], index: 4, kind: input, shape index: {}]
  %s5 = inlined_call_operand.hbm [shape: bf16[128,256], index: 5, kind: input, shape index: {}]
  %s6 = inlined_call_operand.vmem [shape: f32[1,256], index: 6, kind: input, shape index: {}]
  %s7 = inlined_call_operand.vmem [shape: bf16[16,256], index: 7, kind: output, shape index: {}]
  %s8 = sld [smem:[#allocation0]]
  $region46: #{generator_forward.1} parent=0
    _
  %s10 = ssub.s32 1, %s8
  %s11 = scalar_select 0, %s10, %s8
  $region1: #{generator_forward.1} parent=0
    #allocation2 [shape = 'u8[32768]{0}', space=vmem, size = 0x8000, scoped, tag = 'input window, operand 3, single buffered']
    #allocation3 [shape = 's32[1]{0}', space=sflag, size = 0x4, scoped, tag = 'scoped memory for generator_forward.1']
    #allocation4 [shape = 'u8[65536]{0}', space=vmem, size = 0x10000, scoped, tag = 'input window, operand 5, single buffered']
    #allocation5 [shape = 's32[1]{0}', space=sflag, size = 0x4, scoped, tag = 'scoped memory for generator_forward.1']
    %12 = vsyncpa [#allocation3], 0
    %13 = vsyncpa [#allocation5], 0
    // Predicated region
    $region2: #{generator_forward.1} parent=1 // pred_check
      _
    $region3: #{generator_forward.1} parent=1 // pred_check_branch
      %15 = sbr.rel (0) target = $region5
    $region4: #{generator_forward.1} parent=1 // pred_region
      _
    $region5: #{generator_forward.1} parent=1 // pred_fallthru
      _
    // Predicated region
    $region6: #{generator_forward.1} parent=1 // pred_check
      _
    $region7: #{generator_forward.1} parent=1 // pred_check_branch
      %17 = sbr.rel (0) target = $region9
    $region8: #{generator_forward.1} parent=1 // pred_region
      _
    $region9: #{generator_forward.1} parent=1 // pred_fallthru
      _
    // Predicated region
    $region10: #{generator_forward.1} parent=1 // pred_check
      _
    $region11: #{generator_forward.1} parent=1 // pred_check_branch
      %19 = sbr.rel (0) target = $region13
    $region12: #{generator_forward.1} parent=1 // pred_region
      _
    $region13: #{generator_forward.1} parent=1 // pred_fallthru
      _
    // Predicated region
    $region14: #{generator_forward.1} parent=1 // pred_check
      _
    $region15: #{generator_forward.1} parent=1 // pred_check_branch
      %21 = sbr.rel (0) target = $region17
    $region16: #{generator_forward.1} parent=1 // pred_region
      %s23 = ssub.s32 1024, 1024
      %24 = vsyncadd [#allocation3], %s23
      %s25 = sshll.u32 [#allocation2], 4
      %s26 = int_to_ptr.vmem [resolvable:$true] %s25
      %31 = dma.hbm_to_vmem [thread:$0]  %s3, 1024, %s26, [#allocation3], 64, 64, 4
    $region17: #{generator_forward.1} parent=1 // pred_fallthru
      _
    // Predicated region
    $region18: #{generator_forward.1} parent=1 // pred_check
      _
    $region19: #{generator_forward.1} parent=1 // pred_check_branch
      %33 = sbr.rel (0) target = $region21
    $region20: #{generator_forward.1} parent=1 // pred_region
      _
    $region21: #{generator_forward.1} parent=1 // pred_fallthru
      _
    // Predicated region
    $region22: #{generator_forward.1} parent=1 // pred_check
      _
    $region23: #{generator_forward.1} parent=1 // pred_check_branch
      %35 = sbr.rel (0) target = $region25
    $region24: #{generator_forward.1} parent=1 // pred_region
      %s37 = ssub.s32 2048, 2048
      %38 = vsyncadd [#allocation5], %s37
      %s39 = sshll.u32 [#allocation4], 4
      %s40 = int_to_ptr.vmem [resolvable:$true] %s39
      %45 = dma.hbm_to_vmem [thread:$0]  %s5, 2048, %s40, [#allocation5], 128, 128, 8
    $region25: #{generator_forward.1} parent=1 // pred_fallthru
      _
    // Predicated region
    $region26: #{generator_forward.1} parent=1 // pred_check
      _
    $region27: #{generator_forward.1} parent=1 // pred_check_branch
      %47 = sbr.rel (0) target = $region29
    $region28: #{generator_forward.1} parent=1 // pred_region
      _
    $region29: #{generator_forward.1} parent=1 // pred_fallthru
      _
    // Predicated region
    $region30: #{generator_forward.1} parent=1 // pred_check
      _
    $region31: #{generator_forward.1} parent=1 // pred_check_branch
      %49 = sbr.rel (0) target = $region33
    $region32: #{generator_forward.1} parent=1 // pred_region
      %50 = dma.done [#allocation3], 1024
    $region33: #{generator_forward.1} parent=1 // pred_fallthru
      _
    // Predicated region
    $region34: #{generator_forward.1} parent=1 // pred_check
      _
    $region35: #{generator_forward.1} parent=1 // pred_check_branch
      %52 = sbr.rel (0) target = $region37
    $region36: #{generator_forward.1} parent=1 // pred_region
      %53 = dma.done [#allocation5], 2048
    $region37: #{generator_forward.1} parent=1 // pred_fallthru
      _
    %v55 = vld [vmem:[%s0] sm:$0xff]
    %v56 = vld [vmem:[%s0 + $0x8] sm:$0xff]
    %v57 = vpack.c.bf16 %v56, %v55
    %v58 = vld [vmem:[%s1] sm:$0xf]
    %v59 = vld [vmem:[%s1 + $0x4] sm:$0xf]
    %v60 = vld [vmem:[%s2] sm:$0x1]
    %v62 = vlaneseq
    %v63 = vshrl.u32 %v62, 7
    %v64 = vsub.s32 0, %v63
    %v65 = vrot.slane %v60, %v64
    %v69 = vunpack.c.l.b16 %v58
    %v70 = vunpack.c.l.b16 %v59
    %v71 = vpack.c.b16 %v70, %v69
    %vm73 = vcmask 130048
    %v75 = vsel %vm73, %v57, 0
    %77 = vmatprep.subr.bf16.mxu0 0
    %78 = vmatpush1.bf16.msra.mxu0 %v71
    %79 = vmatprep.subr.bf16.mxu0 0
    %80 = vmatpush1.bf16.msra.mxu0 0
    %81 = vmatprep.subr.bf16.mxu0 0
    %82 = vmatpush1.bf16.msra.mxu0 0
    %83 = vmatprep.subr.bf16.mxu0 0
    %84 = vmatpush1.bf16.msra.mxu0 0
    %85 = vmatprep.subr.bf16.mxu0 0
    %86 = vmatpush1.bf16.msra.mxu0 0
    %87 = vmatprep.subr.bf16.mxu0 0
    %88 = vmatpush1.bf16.msra.mxu0 0
    %89 = vmatprep.subr.bf16.mxu0 0
    %90 = vmatpush1.bf16.msra.mxu0 0
    %91 = vmatprep.subr.bf16.mxu0 0
    %92 = vmatpush1.bf16.msra.mxu0 0
    %93 = vmatprep.subr.bf16.mxu0 0
    %94 = vmatpush1.bf16.msra.mxu0 0
    %95 = vmatprep.subr.bf16.mxu0 0
    %96 = vmatpush1.bf16.msra.mxu0 0
    %97 = vmatprep.subr.bf16.mxu0 0
    %98 = vmatpush1.bf16.msra.mxu0 0
    %99 = vmatprep.subr.bf16.mxu0 0
    %100 = vmatpush1.bf16.msra.mxu0 0
    %101 = vmatprep.subr.bf16.mxu0 0
    %102 = vmatpush1.bf16.msra.mxu0 0
    %103 = vmatprep.subr.bf16.mxu0 0
    %104 = vmatpush1.bf16.msra.mxu0 0
    %105 = vmatprep.subr.bf16.mxu0 0
    %106 = vmatpush1.bf16.msra.mxu0 0
    %107 = vmatprep.subr.bf16.mxu0 0
    %108 = vmatpush1.bf16.msra.mxu0 0
    %109 = vmatprep.mubr.bf16.mxu0 0
    %110 = vmatmul.mubr.bf16.gmra.mrb[0].mxu0 %v75
    %v111 = vpop.f32.mrb[0].mxu0
    %v112 = vadd.f32 %v65, %v111
    %v113 = vpop.f32.mrb[0].mxu0
    %v114 = vpop.f32.mrb[0].mxu0
    %v115 = vadd.f32 %v65, %v114
    %v116 = vpop.f32.mrb[0].mxu0
    %117 = vdwg.mxu0
    %v118 = vmax.f32 %v112, 0.0
    %v119 = vmax.f32 %v115, 0.0
    %v120 = vpack.c.bf16 %v119, %v118
    %v121 = vld [vmem:[#allocation2] sm:$0xf]
    %v122 = vld [vmem:[#allocation2 + $0x4] sm:$0xf]
    %v123 = vld [vmem:[#allocation2 + $0x8] sm:$0xf]
    %v124 = vld [vmem:[#allocation2 + $0xc] sm:$0xf]
    %v125 = vld [vmem:[#allocation2 + $0x10] sm:$0xf]
    %v126 = vld [vmem:[#allocation2 + $0x14] sm:$0xf]
    %v127 = vld [vmem:[#allocation2 + $0x18] sm:$0xf]
    %v128 = vld [vmem:[#allocation2 + $0x1c] sm:$0xf]
    %v129 = vld [vmem:[#allocation2 + $0x20] sm:$0xf]
    %v130 = vld [vmem:[#allocation2 + $0x24] sm:$0xf]
    %v131 = vld [vmem:[#allocation2 + $0x28] sm:$0xf]
    %v132 = vld [vmem:[#allocation2 + $0x2c] sm:$0xf]
    %v133 = vld [vmem:[#allocation2 + $0x30] sm:$0xf]
    %v134 = vld [vmem:[#allocation2 + $0x34] sm:$0xf]
    %v135 = vld [vmem:[#allocation2 + $0x38] sm:$0xf]
    %v136 = vld [vmem:[#allocation2 + $0x3c] sm:$0xf]
    %v137 = vld [vmem:[%s4] sm:$0x1]
    %v139 = vlaneseq
    %v140 = vshrl.u32 %v139, 7
    %v141 = vsub.s32 0, %v140
    %v142 = vrot.slane %v137, %v141
    %v160 = vunpack.c.l.b16 %v121
    %v161 = vunpack.c.l.b16 %v122
    %v162 = vunpack.c.l.b16 %v123
    %v163 = vunpack.c.l.b16 %v124
    %v164 = vunpack.c.l.b16 %v125
    %v165 = vunpack.c.l.b16 %v126
    %v166 = vunpack.c.l.b16 %v127
    %v167 = vunpack.c.l.b16 %v128
    %v168 = vunpack.c.l.b16 %v129
    %v169 = vunpack.c.l.b16 %v130
    %v170 = vunpack.c.l.b16 %v131
    %v171 = vunpack.c.l.b16 %v132
    %v172 = vunpack.c.l.b16 %v133
    %v173 = vunpack.c.l.b16 %v134
    %v174 = vunpack.c.l.b16 %v135
    %v175 = vunpack.c.l.b16 %v136
    %v176 = vpack.c.b16 %v161, %v160
    %v177 = vpack.c.b16 %v163, %v162
    %v178 = vpack.c.b16 %v165, %v164
    %v179 = vpack.c.b16 %v167, %v166
    %v180 = vpack.c.b16 %v169, %v168
    %v181 = vpack.c.b16 %v171, %v170
    %v182 = vpack.c.b16 %v173, %v172
    %v183 = vpack.c.b16 %v175, %v174
    %192 = vmatprep.subr.bf16.mxu0 0
    %193 = vmatpush1.bf16.msra.mxu0 %v176
    %194 = vmatprep.subr.bf16.mxu0 0
    %195 = vmatpush1.bf16.msra.mxu0 %v177
    %196 = vmatprep.subr.bf16.mxu0 0
    %197 = vmatpush1.bf16.msra.mxu0 %v178
    %198 = vmatprep.subr.bf16.mxu0 0
    %199 = vmatpush1.bf16.msra.mxu0 %v179
    %200 = vmatprep.subr.bf16.mxu0 0
    %201 = vmatpush1.bf16.msra.mxu0 %v180
    %202 = vmatprep.subr.bf16.mxu0 0
    %203 = vmatpush1.bf16.msra.mxu0 %v181
    %204 = vmatprep.subr.bf16.mxu0 0
    %205 = vmatpush1.bf16.msra.mxu0 %v182
    %206 = vmatprep.subr.bf16.mxu0 0
    %207 = vmatpush1.bf16.msra.mxu0 %v183
    %208 = vmatprep.subr.bf16.mxu0 0
    %209 = vmatpush1.bf16.msra.mxu0 0
    %210 = vmatprep.subr.bf16.mxu0 0
    %211 = vmatpush1.bf16.msra.mxu0 0
    %212 = vmatprep.subr.bf16.mxu0 0
    %213 = vmatpush1.bf16.msra.mxu0 0
    %214 = vmatprep.subr.bf16.mxu0 0
    %215 = vmatpush1.bf16.msra.mxu0 0
    %216 = vmatprep.subr.bf16.mxu0 0
    %217 = vmatpush1.bf16.msra.mxu0 0
    %218 = vmatprep.subr.bf16.mxu0 0
    %219 = vmatpush1.bf16.msra.mxu0 0
    %220 = vmatprep.subr.bf16.mxu0 0
    %221 = vmatpush1.bf16.msra.mxu0 0
    %222 = vmatprep.subr.bf16.mxu0 0
    %223 = vmatpush1.bf16.msra.mxu0 0
    %224 = vmatprep.mubr.bf16.mxu0 0
    %225 = vmatmul.mubr.bf16.gmra.mrb[0].mxu0 %v120
    %v226 = vpop.f32.mrb[0].mxu0
    %v227 = vadd.f32 %v142, %v226
    %v228 = vpop.f32.mrb[0].mxu0
    %v229 = vpop.f32.mrb[0].mxu0
    %v230 = vadd.f32 %v142, %v229
    %v231 = vpop.f32.mrb[0].mxu0
    %232 = vdwg.mxu0
    %v233 = vmax.f32 %v227, 0.0
    %v234 = vmax.f32 %v230, 0.0
    %v235 = vpack.c.bf16 %v234, %v233
    %v236 = vld [vmem:[#allocation4] sm:$0xff]
    %v237 = vld [vmem:[#allocation4 + $0x8] sm:$0xff]
    %v238 = vld [vmem:[#allocation4 + $0x10] sm:$0xff]
    %v239 = vld [vmem:[#allocation4 + $0x18] sm:$0xff]
    %v240 = vld [vmem:[#allocation4 + $0x20] sm:$0xff]
    %v241 = vld [vmem:[#allocation4 + $0x28] sm:$0xff]
    %v242 = vld [vmem:[#allocation4 + $0x30] sm:$0xff]
    %v243 = vld [vmem:[#allocation4 + $0x38] sm:$0xff]
    %v244 = vld [vmem:[#allocation4 + $0x40] sm:$0xff]
    %v245 = vld [vmem:[#allocation4 + $0x48] sm:$0xff]
    %v246 = vld [vmem:[#allocation4 + $0x50] sm:$0xff]
    %v247 = vld [vmem:[#allocation4 + $0x58] sm:$0xff]
    %v248 = vld [vmem:[#allocation4 + $0x60] sm:$0xff]
    %v249 = vld [vmem:[#allocation4 + $0x68] sm:$0xff]
    %v250 = vld [vmem:[#allocation4 + $0x70] sm:$0xff]
    %v251 = vld [vmem:[#allocation4 + $0x78] sm:$0xff]
    %v252 = vld [vmem:[%s6] sm:$0x3]
    %v254 = vlaneseq
    %v255 = vshrl.u32 %v254, 7
    %v256 = vsub.s32 0, %v255
    %v257 = vrot.slane %v252, %v256
    %v258 = vlaneseq
    %v259 = vshrl.u32 %v258, 7
    %v260 = vsub.s32 1, %v259
    %v261 = vrot.slane %v252, %v260
    %v280 = vunpack.c.l.b16 %v236
    %v281 = vunpack.c.h.b16 %v236
    %v282 = vunpack.c.l.b16 %v237
    %v283 = vunpack.c.h.b16 %v237
    %v284 = vunpack.c.l.b16 %v238
    %v285 = vunpack.c.h.b16 %v238
    %v286 = vunpack.c.l.b16 %v239
    %v287 = vunpack.c.h.b16 %v239
    %v288 = vunpack.c.l.b16 %v240
    %v289 = vunpack.c.h.b16 %v240
    %v290 = vunpack.c.l.b16 %v241
    %v291 = vunpack.c.h.b16 %v241
    %v292 = vunpack.c.l.b16 %v242
    %v293 = vunpack.c.h.b16 %v242
    %v294 = vunpack.c.l.b16 %v243
    %v295 = vunpack.c.h.b16 %v243
    %v296 = vunpack.c.l.b16 %v244
    %v297 = vunpack.c.h.b16 %v244
    %v298 = vunpack.c.l.b16 %v245
    %v299 = vunpack.c.h.b16 %v245
    %v300 = vunpack.c.l.b16 %v246
    %v301 = vunpack.c.h.b16 %v246
    %v302 = vunpack.c.l.b16 %v247
    %v303 = vunpack.c.h.b16 %v247
    %v304 = vunpack.c.l.b16 %v248
    %v305 = vunpack.c.h.b16 %v248
    %v306 = vunpack.c.l.b16 %v249
    %v307 = vunpack.c.h.b16 %v249
    %v308 = vunpack.c.l.b16 %v250
    %v309 = vunpack.c.h.b16 %v250
    %v310 = vunpack.c.l.b16 %v251
    %v311 = vunpack.c.h.b16 %v251
    %v312 = vpack.c.b16 %v282, %v280
    %v313 = vpack.c.b16 %v283, %v281
    %v314 = vpack.c.b16 %v286, %v284
    %v315 = vpack.c.b16 %v287, %v285
    %v316 = vpack.c.b16 %v290, %v288
    %v317 = vpack.c.b16 %v291, %v289
    %v318 = vpack.c.b16 %v294, %v292
    %v319 = vpack.c.b16 %v295, %v293
    %v320 = vpack.c.b16 %v298, %v296
    %v321 = vpack.c.b16 %v299, %v297
    %v322 = vpack.c.b16 %v302, %v300
    %v323 = vpack.c.b16 %v303, %v301
    %v324 = vpack.c.b16 %v306, %v304
    %v325 = vpack.c.b16 %v307, %v305
    %v326 = vpack.c.b16 %v310, %v308
    %v327 = vpack.c.b16 %v311, %v309
    %344 = vmatprep.subr.bf16.mxu0 %v313
    %345 = vmatpush1.bf16.msra.mxu0 %v312
    %346 = vmatprep.subr.bf16.mxu0 %v315
    %347 = vmatpush1.bf16.msra.mxu0 %v314
    %348 = vmatprep.subr.bf16.mxu0 %v317
    %349 = vmatpush1.bf16.msra.mxu0 %v316
    %350 = vmatprep.subr.bf16.mxu0 %v319
    %351 = vmatpush1.bf16.msra.mxu0 %v318
    %352 = vmatprep.subr.bf16.mxu0 %v321
    %353 = vmatpush1.bf16.msra.mxu0 %v320
    %354 = vmatprep.subr.bf16.mxu0 %v323
    %355 = vmatpush1.bf16.msra.mxu0 %v322
    %356 = vmatprep.subr.bf16.mxu0 %v325
    %357 = vmatpush1.bf16.msra.mxu0 %v324
    %358 = vmatprep.subr.bf16.mxu0 %v327
    %359 = vmatpush1.bf16.msra.mxu0 %v326
    %360 = vmatprep.subr.bf16.mxu0 0
    %361 = vmatpush1.bf16.msra.mxu0 0
    %362 = vmatprep.subr.bf16.mxu0 0
    %363 = vmatpush1.bf16.msra.mxu0 0
    %364 = vmatprep.subr.bf16.mxu0 0
    %365 = vmatpush1.bf16.msra.mxu0 0
    %366 = vmatprep.subr.bf16.mxu0 0
    %367 = vmatpush1.bf16.msra.mxu0 0
    %368 = vmatprep.subr.bf16.mxu0 0
    %369 = vmatpush1.bf16.msra.mxu0 0
    %370 = vmatprep.subr.bf16.mxu0 0
    %371 = vmatpush1.bf16.msra.mxu0 0
    %372 = vmatprep.subr.bf16.mxu0 0
    %373 = vmatpush1.bf16.msra.mxu0 0
    %374 = vmatprep.subr.bf16.mxu0 0
    %375 = vmatpush1.bf16.msra.mxu0 0
    %376 = vmatprep.mubr.bf16.mxu0 0
    %377 = vmatmul.mubr.bf16.gmra.mrb[0].mxu0 %v235
    %v378 = vpop.f32.mrb[0].mxu0
    %v379 = vadd.f32 %v257, %v378
    %v380 = vpop.f32.mrb[0].mxu0
    %v381 = vadd.f32 %v261, %v380
    %v382 = vpop.f32.mrb[0].mxu0
    %v383 = vadd.f32 %v257, %v382
    %v384 = vpop.f32.mrb[0].mxu0
    %v385 = vadd.f32 %v261, %v384
    %386 = vdwg.mxu0
    %v387 = vtanh.pop %v379
    %v388 = vtanh.pop %v381
    %v389 = vtanh.pop %v383
    %v390 = vtanh.pop %v385
    %v391 = vpack.c.bf16 %v389, %v387
    %v392 = vpack.c.bf16 %v390, %v388
    %v395 = vunpack.c.l.b16 %v391
    %v396 = vunpack.c.l.b16 %v392
    %v397 = vunpack.c.h.b16 %v391
    %v398 = vunpack.c.h.b16 %v392
    %v399 = vpack.c.b16 %v396, %v395
    %v400 = vpack.c.b16 %v398, %v397
    %403 = vst [vmem:[%s7] sm:$0xff] %v399
    %404 = vst [vmem:[%s7 + $0x8] sm:$0xff] %v400
    // Predicated region
    $region38: #{generator_forward.1} parent=1 // pred_check
      _
    $region39: #{generator_forward.1} parent=1 // pred_check_branch
      %406 = sbr.rel (0) target = $region41
    $region40: #{generator_forward.1} parent=1 // pred_region
      _
    $region41: #{generator_forward.1} parent=1 // pred_fallthru
      _
    // Predicated region
    $region42: #{generator_forward.1} parent=1 // pred_check
      _
    $region43: #{generator_forward.1} parent=1 // pred_check_branch
      %408 = sbr.rel (0) target = $region45
    $region44: #{generator_forward.1} parent=1 // pred_region
      _
    $region45: #{generator_forward.1} parent=1 // pred_fallthru
      _
    %409 = vsyncpa [#allocation3], 1
    %410 = vsyncpa [#allocation5], 1

</llo_original>
